<compile_context>
chip_gen: v6e
topology: v6e:2x2x1
jax: 0.10.0
libtpu: 0.0.40
codegen_flags: <defaults>
</compile_context>

<pallas_src>
import numpy as np
import jax
import jax.numpy as jnp
from jax import lax
from jax.experimental import pallas as pl
from jax.experimental.pallas import tpu as pltpu


def _round_up(x, m):
    return ((x + m - 1) // m) * m


# ----------------------------------------------------------------------------
# Kernel 1: feature-fusion attention  +  hoisted wide-gate GRU input projection
#   gi[rows] = relu-attn-fused(loc, tim) @ W_ih_wide + b_ih_wide   (bf16 out)
# ----------------------------------------------------------------------------
def _fusion_gi_kernel(loc_ref, tim_ref, w1_ref, b1_ref, w2_ref, wih_ref, bih_ref,
                      gi_ref):
    loc = loc_ref[...]                                       # (TM, Hp) f32
    tim = tim_ref[...]
    w1 = w1_ref[...]                                         # (Hp, Ap) bf16
    b1 = b1_ref[...]                                         # (1, Ap)  f32
    w2 = w2_ref[...]                                         # (1, Ap)  f32

    # Two small MXU pushes (no in-kernel concat copy).
    h_loc = jnp.maximum(jnp.dot(loc.astype(jnp.bfloat16), w1,
                                preferred_element_type=jnp.float32) + b1, 0.0)
    h_tim = jnp.maximum(jnp.dot(tim.astype(jnp.bfloat16), w1,
                                preferred_element_type=jnp.float32) + b1, 0.0)

    # The 10 -> 1 layer folded into a VPU multiply + lane reduce (no MXU drain).
    # The +b2 bias is dropped: a constant added to both 2-way softmax logits
    # cancels exactly.
    s_loc = jnp.sum(h_loc * w2, axis=-1, keepdims=True)      # (TM, 1)
    s_tim = jnp.sum(h_tim * w2, axis=-1, keepdims=True)

    m = jnp.maximum(s_loc, s_tim)
    e_loc = jnp.exp(s_loc - m)
    e_tim = jnp.exp(s_tim - m)
    inv = pl.reciprocal(e_loc + e_tim, approx=True)          # EUP slot
    fused = (e_loc * inv) * loc + (e_tim * inv) * tim        # (TM, Hp) f32

    # ONE wide MXU push for all three GRU gates ([r|z|n] along the lane axis),
    # written back as a single contiguous lane-dense bf16 store.
    gi = jnp.dot(fused.astype(jnp.bfloat16), wih_ref[...],
                 preferred_element_type=jnp.float32) + bih_ref[...]
    gi_ref[...] = gi.astype(jnp.bfloat16)


def fusion_gi_pallas(loc_flat, tim_flat, w1, b1, w2, w_ih_wide, b_ih_wide):
    M, Hp = loc_flat.shape
    G = w_ih_wide.shape[1]                       # 3*Hp
    TM = 1024 if M >= 1024 else _round_up(M, 8)  # big row tiles (v6e sweet spot)
    Mpad = _round_up(M, TM)
    if Mpad != M:
        pad = Mpad - M
        loc_flat = jnp.pad(loc_flat, ((0, pad), (0, 0)))
        tim_flat = jnp.pad(tim_flat, ((0, pad), (0, 0)))

    gi = pl.pallas_call(
        _fusion_gi_kernel,
        out_shape=jax.ShapeDtypeStruct((Mpad, G), jnp.bfloat16),
        grid=(Mpad // TM,),
        in_specs=[
            pl.BlockSpec((TM, Hp), lambda i: (i, 0)),
            pl.BlockSpec((TM, Hp), lambda i: (i, 0)),
            pl.BlockSpec(w1.shape, lambda i: (0, 0)),
            pl.BlockSpec(b1.shape, lambda i: (0, 0)),
            pl.BlockSpec(w2.shape, lambda i: (0, 0)),
            pl.BlockSpec(w_ih_wide.shape, lambda i: (0, 0)),
            pl.BlockSpec(b_ih_wide.shape, lambda i: (0, 0)),
        ],
        out_specs=pl.BlockSpec((TM, G), lambda i: (i, 0)),
        compiler_params=pltpu.CompilerParams(
            dimension_semantics=("parallel",)),
    )(loc_flat, tim_flat, w1, b1, w2, w_ih_wide, b_ih_wide)
    return gi[:M]


# ----------------------------------------------------------------------------
# Kernel 2: fused GRU recurrence (wide gates) + spatio-temporal weighted
#           pooling + FC head (time-chunk pipelined; h & pooled sum in VMEM)
# ----------------------------------------------------------------------------
def _gru_head_kernel(gi_ref, wgt_ref, whh_ref, bhh_ref, fcw_ref, fcb_ref,
                     bias_ref, out_ref, h_ref, acc_ref):
    TL = gi_ref.shape[0]
    Hp = h_ref.shape[-1]
    t_blk = pl.program_id(0)

    @pl.when(t_blk == 0)
    def _():
        h_ref[...] = jnp.zeros_like(h_ref)
        acc_ref[...] = jnp.zeros_like(acc_ref)

    def body(t, carry):
        h, acc = carry
        # One wide (N,Hp)@(Hp,3Hp) MXU push per step; recurrent weights are
        # streamed from their VMEM ref (not hoisted into vregs).
        gh = jnp.dot(h.astype(jnp.bfloat16), whh_ref[...],
                     preferred_element_type=jnp.float32) + bhh_ref[...]
        gi_t = gi_ref[t].astype(jnp.float32)                 # (N, 3Hp)
        r = jax.nn.sigmoid(gi_t[:, :Hp] + gh[:, :Hp])
        z = jax.nn.sigmoid(gi_t[:, Hp:2 * Hp] + gh[:, Hp:2 * Hp])
        n = jnp.tanh(gi_t[:, 2 * Hp:] + r * gh[:, 2 * Hp:])
        h_new = (1.0 - z) * n + z * h
        # Weighted pooling fused into the recurrence (hs never hits HBM).
        acc = acc + wgt_ref[t] * h_new
        return (h_new, acc)

    h, acc = lax.fori_loop(0, TL, body, (h_ref[...], acc_ref[...]), unroll=True)
    h_ref[...] = h
    acc_ref[...] = acc

    @pl.when(t_blk == pl.num_programs(0) - 1)
    def _():
        out_ref[...] = (jnp.dot(acc.astype(jnp.bfloat16), fcw_ref[...],
                                preferred_element_type=jnp.float32)
                        + fcb_ref[...] + bias_ref[...])


def gru_head_pallas(gi, wgt, w_hh_wide, b_hh_wide, fc_w, fc_b, bias_rows):
    Lseq, N, G = gi.shape
    Hp = w_hh_wide.shape[0]
    Lp = fc_w.shape[1]

    # Time-chunk size re-derived against a VMEM budget (double-buffered gi
    # chunk kept under ~24 MiB so the kernel also fits v7x's 64 MiB VMEM).
    gi_bytes_per_step = N * G * 2                     # bf16
    tl = 32
    while tl > 4 and 2 * tl * gi_bytes_per_step > 24 * 1024 * 1024:
        tl //= 2
    TL = max(1, min(tl, Lseq))
    Lpad = _round_up(Lseq, TL)
    if Lpad != Lseq:
        # Padded trailing steps carry zero pooling weight -> no contribution.
        gi = jnp.pad(gi, ((0, Lpad - Lseq), (0, 0), (0, 0)))
        wgt = jnp.pad(wgt, ((0, Lpad - Lseq), (0, 0), (0, 0)))

    # TODO(synk): for very large batch N on v7x, add a parallel N-tile grid
    # axis so both TensorCores share the recurrence; N here is tiny.
    return pl.pallas_call(
        _gru_head_kernel,
        out_shape=jax.ShapeDtypeStruct((N, Lp), jnp.float32),
        grid=(Lpad // TL,),
        in_specs=[
            pl.BlockSpec((TL, N, G), lambda t: (t, 0, 0)),   # gi (time-major, wide gates, bf16)
            pl.BlockSpec((TL, N, 1), lambda t: (t, 0, 0)),   # pooling weights
            pl.BlockSpec((Hp, G), lambda t: (0, 0)),         # W_hh wide (bf16)
            pl.BlockSpec((1, G), lambda t: (0, 0)),          # b_hh wide
            pl.BlockSpec((Hp, Lp), lambda t: (0, 0)),        # FC weight (bf16)
            pl.BlockSpec((1, Lp), lambda t: (0, 0)),         # FC bias
            pl.BlockSpec((N, Lp), lambda t: (0, 0)),         # spatial bias rows
        ],
        out_specs=pl.BlockSpec((N, Lp), lambda t: (0, 0)),
        scratch_shapes=[pltpu.VMEM((N, Hp), jnp.float32),    # hidden state
                        pltpu.VMEM((N, Hp), jnp.float32)],   # pooled accumulator
        compiler_params=pltpu.CompilerParams(
            dimension_semantics=("arbitrary",),
            vmem_limit_bytes=48 * 1024 * 1024),
    )(gi, wgt, w_hh_wide, b_hh_wide, fc_w, fc_b, bias_rows)


# ----------------------------------------------------------------------------
# Pure-JAX references (exact, f32, unpadded) for correctness checking
# ----------------------------------------------------------------------------
def _fused_ref(loc_flat, tim_flat, w1, b1, w2, b2):
    def score(v):
        h = jnp.maximum(v @ w1 + b1, 0.0)
        return h @ w2 + b2                 # b2 kept here (original form)
    s_loc = score(loc_flat)
    s_tim = score(tim_flat)
    m = jnp.maximum(s_loc, s_tim)
    e_loc = jnp.exp(s_loc - m)
    e_tim = jnp.exp(s_tim - m)
    inv = 1.0 / (e_loc + e_tim)
    return e_loc * inv * loc_flat + e_tim * inv * tim_flat


def _gru_pool_fc_ref(fused_seq, wgt, w_ih, b_ih, w_hh, b_hh, fc_w_t, fc_b, bias_rows):
    Lseq, N, H = fused_seq.shape
    h = jnp.zeros((N, H), jnp.float32)
    acc = jnp.zeros((N, H), jnp.float32)
    for t in range(Lseq):
        xt = fused_seq[t]
        gi_r = xt @ w_ih[0] + b_ih[0]
        gi_z = xt @ w_ih[1] + b_ih[1]
        gi_n = xt @ w_ih[2] + b_ih[2]
        gh_r = h @ w_hh[0] + b_hh[0]
        gh_z = h @ w_hh[1] + b_hh[1]
        gh_n = h @ w_hh[2] + b_hh[2]
        r = jax.nn.sigmoid(gi_r + gh_r)
        z = jax.nn.sigmoid(gi_z + gh_z)
        n = jnp.tanh(gi_n + r * gh_n)
        h = (1.0 - z) * n + z * h
        acc = acc + wgt[t] * h
    return acc @ fc_w_t + fc_b + bias_rows


# ----------------------------------------------------------------------------
# Full forward (mode == 'WholeModelTrain')
# ----------------------------------------------------------------------------
def location_semantic_forward(params, data, use_pallas=True):
    x = data["x"]                                   # (B, Len, 5) float32
    loc_idx = data["locOneHot"][..., 0]             # (B, Len) int32
    B_, Len_ = loc_idx.shape
    H_ = params["loc_emb"].shape[1]
    L_ = params["fc_w_t"].shape[1]

    # --- Encoder ---------------------------------------------------------
    _usr_idx = jnp.argmax(data["usrOneHot"], axis=-1)   # computed but unused (as in torch)
    hour_idx = x[:, :, 4].astype(jnp.int32)
    # Time-major gathers so the gi intermediate is produced directly in the
    # (Len, N, 3H) layout the recurrence consumes (no big transpose).
    locEmb_t = params["loc_emb"][loc_idx.T]              # (Len, B, H)
    timEmb_t = params["tim_emb"][hour_idx.T]             # (Len, B, H)
    loc_flat = locEmb_t.reshape(Len_ * B_, H_).astype(jnp.float32)
    tim_flat = timEmb_t.reshape(Len_ * B_, H_).astype(jnp.float32)

    time_seq = x[:, :, 2]                                # (B, Len)
    spa_seq = x[:, :, 0:2]                               # (B, Len, 2)

    # --- ValidTrjs regrouping --------------------------------------------
    # TODO(synk): torch packs ragged per-user trajectory lists (pack_sequence);
    # here each group is one full equal-length trajectory so shapes stay static.
    last_time = time_seq[:, -1]                          # (N,)
    last_spa = spa_seq[:, -1, :]                         # (N, 2)
    last_pos_ids = loc_idx[:, -1]                        # (N,)

    last_time_r = jnp.broadcast_to(last_time[:, None], (B_, Len_))
    minus_res = (last_time_r - time_seq) / 86400.0
    keep = minus_res != last_time_r
    # Guarded form of exp(-|log(keep*e)|*minus_res): avoids inf*0 NaN.
    wgh = jnp.where(keep, jnp.exp(-minus_res * params["scalar"]), 0.0)

    last_spa_r = jnp.broadcast_to(last_spa[:, None, :], (B_, Len_, 2))
    minus_res_spa = jnp.linalg.norm(last_spa_r - spa_seq, axis=-1)
    keep_spa = minus_res_spa != jnp.linalg.norm(last_spa_r, axis=-1)
    wgh_spa = jnp.where(keep_spa,
                        jnp.exp(-minus_res_spa * params["spatial_scalar"]), 0.0)

    spa_tem_wgh = wgh * wgh_spa
    denom = jnp.maximum(spa_tem_wgh.sum(axis=1, keepdims=True), 1e-12)
    spa_tem_wgh_norm = spa_tem_wgh / denom               # (N, Len)
    wgt = spa_tem_wgh_norm.T[:, :, None]                 # (Len, N, 1)

    bias_rows = data["spa_dis_mat_e"][last_pos_ids]      # (N, locationSize)

    if not use_pallas:
        fused = _fused_ref(loc_flat, tim_flat,
                           params["att_w1"], params["att_b1"],
                           params["att_w2"], params["att_b2"])
        fused_seq = fused.reshape(Len_, B_, H_)
        return _gru_pool_fc_ref(fused_seq, wgt, params["w_ih"], params["b_ih"],
                                params["w_hh"], params["b_hh"],
                                params["fc_w_t"], params["fc_b"], bias_rows)

    # --- padded / wide parameter layouts for the TPU kernels ---------------
    Hp = _round_up(H_, 128)          # hidden padded to one lane group
    Ap = 128                         # attention hidden (10) padded to 128
    Lp = _round_up(L_, 128)          # locationSize padded (lane-dense output)
    A_ = params["att_w1"].shape[1]

    loc_p = jnp.pad(loc_flat, ((0, 0), (0, Hp - H_)))
    tim_p = jnp.pad(tim_flat, ((0, 0), (0, Hp - H_)))

    w1_p = jnp.zeros((Hp, Ap), jnp.float32).at[:H_, :A_].set(
        params["att_w1"]).astype(jnp.bfloat16)
    b1_p = jnp.zeros((1, Ap), jnp.float32).at[:, :A_].set(params["att_b1"])
    w2_p = jnp.zeros((1, Ap), jnp.float32).at[:, :A_].set(
        params["att_w2"].reshape(1, A_))

    def widen(w3, b3):
        w = jnp.zeros((Hp, 3 * Hp), jnp.float32)
        b = jnp.zeros((1, 3 * Hp), jnp.float32)
        for g in range(3):                               # gate order [r|z|n]
            w = w.at[:H_, g * Hp:g * Hp + H_].set(w3[g])
            b = b.at[:, g * Hp:g * Hp + H_].set(b3[g])
        return w, b

    w_ih_wide, b_ih_wide = widen(params["w_ih"], params["b_ih"])
    w_hh_wide, b_hh_wide = widen(params["w_hh"], params["b_hh"])
    w_ih_wide = w_ih_wide.astype(jnp.bfloat16)
    w_hh_wide = w_hh_wide.astype(jnp.bfloat16)

    fc_w_p = jnp.zeros((Hp, Lp), jnp.float32).at[:H_, :L_].set(
        params["fc_w_t"]).astype(jnp.bfloat16)
    fc_b_p = jnp.zeros((1, Lp), jnp.float32).at[:, :L_].set(params["fc_b"])
    bias_p = jnp.zeros((B_, Lp), jnp.float32).at[:, :L_].set(bias_rows)

    # --- kernel 1: fusion attention + wide-gate input projection -----------
    gi_flat = fusion_gi_pallas(loc_p, tim_p, w1_p, b1_p, w2_p,
                               w_ih_wide, b_ih_wide)          # (Len*B, 3Hp) bf16
    gi = gi_flat.reshape(Len_, B_, 3 * Hp)                    # already time-major

    # --- kernel 2: fused GRU + weighted pooling + FC + spatial bias --------
    out = gru_head_pallas(gi, wgt, w_hh_wide, b_hh_wide, fc_w_p, fc_b_p, bias_p)
    return out[:, :L_]


# ----------------------------------------------------------------------------
if __name__ == "__main__":
    B, Len, H, L = 2, 8, 32, 16          # trajectories, seq len, hiddenSize, locationSize
    key = jax.random.PRNGKey(0)
    ks = jax.random.split(key, 16)

    params = {
        # Encoder embeddings (locEmbDim == TemporalEmbDim == hiddenSize)
        "loc_emb": 0.1 * jax.random.normal(ks[0], (L, H), jnp.float32),
        "tim_emb": 0.1 * jax.random.normal(ks[1], (169, H), jnp.float32),
        # Attention(input_Dim=hiddenSize): Linear(H,10) -> ReLU -> Linear(10,1)
        "att_w1": 0.1 * jax.random.normal(ks[2], (H, 10), jnp.float32),
        "att_b1": 0.1 * jax.random.normal(ks[3], (1, 10), jnp.float32),
        "att_w2": 0.1 * jax.random.normal(ks[4], (10, 1), jnp.float32),
        "att_b2": 0.1 * jax.random.normal(ks[5], (1, 1), jnp.float32),
        # GRU (1 layer), gate-major transposed weights, gate order [r | z | n]
        "w_ih": 0.1 * jax.random.normal(ks[6], (3, H, H), jnp.float32),
        "b_ih": 0.1 * jax.random.normal(ks[7], (3, 1, H), jnp.float32),
        "w_hh": 0.1 * jax.random.normal(ks[8], (3, H, H), jnp.float32),
        "b_hh": 0.1 * jax.random.normal(ks[9], (3, 1, H), jnp.float32),
        # FC(hiddenSize -> locationSize)
        "fc_w_t": 0.1 * jax.random.normal(ks[10], (H, L), jnp.float32),
        "fc_b": 0.1 * jax.random.normal(ks[11], (1, L), jnp.float32),
        # SpaTemSca
        "scalar": 0.1,
        "spatial_scalar": 0.5,
    }

    # ----- deterministic example inputs -----
    spa_xy = jax.random.uniform(ks[12], (B, Len, 2), jnp.float32, 0.0, 10.0)
    hour_idx = jax.random.randint(ks[13], (B, Len), 0, 169)
    loc_idx = jax.random.randint(ks[14], (B, Len), 0, L)
    time_col = (1_000_000.0
                + 3600.0 * jnp.arange(Len, dtype=jnp.float32)[None, :]
                + 7200.0 * jnp.arange(B, dtype=jnp.float32)[:, None])       # (B, Len)
    x = jnp.concatenate(
        [spa_xy,
         time_col[..., None],
         jnp.zeros((B, Len, 1), jnp.float32),
         hour_idx[..., None].astype(jnp.float32)],
        axis=-1)                                                            # (B, Len, 5)

    data = {
        "x": x,
        "usrOneHot": jax.random.uniform(ks[15], (B, Len, 4), jnp.float32),
        "locOneHot": loc_idx[..., None].astype(jnp.int32),
        "spa_dis_mat_e": 0.1 * jax.random.normal(key, (L, L), jnp.float32),
    }

    out = location_semantic_forward(params, data, use_pallas=True)
    out = jax.block_until_ready(out)

    # sanity check against a pure-JAX (exact, f32) reference of the same forward
    ref = jax.block_until_ready(location_semantic_forward(params, data, use_pallas=False))
    assert out.shape == (B, L)
    np.testing.assert_allclose(np.asarray(out), np.asarray(ref), rtol=2e-2, atol=2e-2)

    print("KERNEL_OK")
</pallas_src>

<mosaic_0001>
module attributes {stable_mosaic.version = 11 : i64} {
  func.func @_fusion_gi_kernel(%arg0: i32, %arg1: memref<16x128xf32, #tpu.memory_space<vmem>>, %arg2: memref<16x128xf32, #tpu.memory_space<vmem>>, %arg3: memref<128x128xbf16, #tpu.memory_space<vmem>>, %arg4: memref<1x128xf32, #tpu.memory_space<vmem>>, %arg5: memref<1x128xf32, #tpu.memory_space<vmem>>, %arg6: memref<128x384xbf16, #tpu.memory_space<vmem>>, %arg7: memref<1x384xf32, #tpu.memory_space<vmem>>, %arg8: memref<16x384xbf16, #tpu.memory_space<vmem>>) attributes {dimension_semantics = [#tpu.dimension_semantics<parallel>], iteration_bounds = array<i64: 1>, scalar_prefetch = 0 : i64, scratch_operands = 0 : i64, tpu.core_type = #tpu.core_type<tc>, window_params = [{transform_indices = @transform_0, window_bounds = array<i64: 16, 128>}, {transform_indices = @transform_1, window_bounds = array<i64: 16, 128>}, {pipeline_mode = #tpu.pipeline_mode<synchronous>, transform_indices = @transform_2, window_bounds = array<i64: 128, 128>}, {pipeline_mode = #tpu.pipeline_mode<synchronous>, transform_indices = @transform_3, window_bounds = array<i64: 1, 128>}, {pipeline_mode = #tpu.pipeline_mode<synchronous>, transform_indices = @transform_4, window_bounds = array<i64: 1, 128>}, {pipeline_mode = #tpu.pipeline_mode<synchronous>, transform_indices = @transform_5, window_bounds = array<i64: 128, 384>}, {pipeline_mode = #tpu.pipeline_mode<synchronous>, transform_indices = @transform_6, window_bounds = array<i64: 1, 384>}, {transform_indices = @transform_7, window_bounds = array<i64: 16, 384>}]} {
    %c0 = arith.constant 0 : index
    %c0_0 = arith.constant 0 : index
    %0 = vector.load %arg1[%c0, %c0_0] : memref<16x128xf32, #tpu.memory_space<vmem>>, vector<16x128xf32>
    %c0_1 = arith.constant 0 : index
    %c0_2 = arith.constant 0 : index
    %1 = vector.load %arg2[%c0_1, %c0_2] : memref<16x128xf32, #tpu.memory_space<vmem>>, vector<16x128xf32>
    %c0_3 = arith.constant 0 : index
    %c0_4 = arith.constant 0 : index
    %2 = vector.load %arg3[%c0_3, %c0_4] : memref<128x128xbf16, #tpu.memory_space<vmem>>, vector<128x128xbf16>
    %c0_5 = arith.constant 0 : index
    %c0_6 = arith.constant 0 : index
    %3 = vector.load %arg4[%c0_5, %c0_6] : memref<1x128xf32, #tpu.memory_space<vmem>>, vector<1x128xf32>
    %c0_7 = arith.constant 0 : index
    %c0_8 = arith.constant 0 : index
    %4 = vector.load %arg5[%c0_7, %c0_8] : memref<1x128xf32, #tpu.memory_space<vmem>>, vector<1x128xf32>
    %5 = arith.truncf %0 : vector<16x128xf32> to vector<16x128xbf16>
    %cst = arith.constant dense<0.000000e+00> : vector<16x128xf32>
    %6 = tpu.matmul %5, %2, %cst {dimension_numbers = #tpu.dot_dimension_numbers<[1], [0], [0], [1], [0, 0, 1, 1], [], []>} : vector<16x128xbf16>, vector<128x128xbf16>, vector<16x128xf32> -> vector<16x128xf32>
    %7 = vector.broadcast %3 : vector<1x128xf32> to vector<16x128xf32>
    %8 = arith.addf %6, %7 : vector<16x128xf32>
    %cst_9 = arith.constant 0.000000e+00 : f32
    %9 = vector.broadcast %cst_9 : f32 to vector<16x128xf32>
    %10 = arith.maximumf %8, %9 : vector<16x128xf32>
    %11 = arith.truncf %1 : vector<16x128xf32> to vector<16x128xbf16>
    %cst_10 = arith.constant dense<0.000000e+00> : vector<16x128xf32>
    %12 = tpu.matmul %11, %2, %cst_10 {dimension_numbers = #tpu.dot_dimension_numbers<[1], [0], [0], [1], [0, 0, 1, 1], [], []>} : vector<16x128xbf16>, vector<128x128xbf16>, vector<16x128xf32> -> vector<16x128xf32>
    %13 = vector.broadcast %3 : vector<1x128xf32> to vector<16x128xf32>
    %14 = arith.addf %12, %13 : vector<16x128xf32>
    %cst_11 = arith.constant 0.000000e+00 : f32
    %15 = vector.broadcast %cst_11 : f32 to vector<16x128xf32>
    %16 = arith.maximumf %14, %15 : vector<16x128xf32>
    %17 = vector.broadcast %4 : vector<1x128xf32> to vector<16x128xf32>
    %18 = arith.mulf %10, %17 : vector<16x128xf32>
    %cst_12 = arith.constant dense<0.000000e+00> : vector<16xf32>
    %19 = vector.multi_reduction <add>, %18, %cst_12 [1] : vector<16x128xf32> to vector<16xf32>
    %20 = vector.shape_cast %19 : vector<16xf32> to vector<16x1xf32>
    %21 = vector.broadcast %4 : vector<1x128xf32> to vector<16x128xf32>
    %22 = arith.mulf %16, %21 : vector<16x128xf32>
    %cst_13 = arith.constant dense<0.000000e+00> : vector<16xf32>
    %23 = vector.multi_reduction <add>, %22, %cst_13 [1] : vector<16x128xf32> to vector<16xf32>
    %24 = vector.shape_cast %23 : vector<16xf32> to vector<16x1xf32>
    %25 = arith.maximumf %20, %24 : vector<16x1xf32>
    %26 = arith.subf %20, %25 : vector<16x1xf32>
    %27 = math.exp %26 : vector<16x1xf32>
    %28 = arith.subf %24, %25 : vector<16x1xf32>
    %29 = math.exp %28 : vector<16x1xf32>
    %30 = arith.addf %27, %29 : vector<16x1xf32>
    %31 = tpu.reciprocal %30 {approx = true} : vector<16x1xf32> -> vector<16x1xf32>
    %32 = arith.mulf %27, %31 : vector<16x1xf32>
    %33 = vector.broadcast %32 : vector<16x1xf32> to vector<16x128xf32>
    %34 = arith.mulf %33, %0 : vector<16x128xf32>
    %35 = arith.mulf %29, %31 : vector<16x1xf32>
    %36 = vector.broadcast %35 : vector<16x1xf32> to vector<16x128xf32>
    %37 = arith.mulf %36, %1 : vector<16x128xf32>
    %38 = arith.addf %34, %37 : vector<16x128xf32>
    %39 = arith.truncf %38 : vector<16x128xf32> to vector<16x128xbf16>
    %c0_14 = arith.constant 0 : index
    %c0_15 = arith.constant 0 : index
    %40 = vector.load %arg6[%c0_14, %c0_15] : memref<128x384xbf16, #tpu.memory_space<vmem>>, vector<128x384xbf16>
    %cst_16 = arith.constant dense<0.000000e+00> : vector<16x384xf32>
    %41 = tpu.matmul %39, %40, %cst_16 {dimension_numbers = #tpu.dot_dimension_numbers<[1], [0], [0], [1], [0, 0, 1, 1], [], []>} : vector<16x128xbf16>, vector<128x384xbf16>, vector<16x384xf32> -> vector<16x384xf32>
    %c0_17 = arith.constant 0 : index
    %c0_18 = arith.constant 0 : index
    %42 = vector.load %arg7[%c0_17, %c0_18] : memref<1x384xf32, #tpu.memory_space<vmem>>, vector<1x384xf32>
    %43 = vector.broadcast %42 : vector<1x384xf32> to vector<16x384xf32>
    %44 = arith.addf %41, %43 : vector<16x384xf32>
    %45 = arith.truncf %44 : vector<16x384xf32> to vector<16x384xbf16>
    %c0_19 = arith.constant 0 : index
    %c0_20 = arith.constant 0 : index
    %46 = vector.load %arg8[%c0_19, %c0_20] : memref<16x384xbf16, #tpu.memory_space<vmem>>, vector<16x384xbf16>
    tpu.vector_store %arg8[%c0_19, %c0_20], %45 {strides = array<i32>} : memref<16x384xbf16, #tpu.memory_space<vmem>>, vector<16x384xbf16>,
    return
  }
  func.func @transform_0(%arg0: i32) -> (i32, i32) {
    %c0_i32 = arith.constant 0 : i32
    %c0_i32_0 = arith.constant 0 : i32
    return %arg0, %c0_i32 : i32, i32
  }
  func.func @transform_1(%arg0: i32) -> (i32, i32) {
    %c0_i32 = arith.constant 0 : i32
    %c0_i32_0 = arith.constant 0 : i32
    return %arg0, %c0_i32 : i32, i32
  }
  func.func @transform_2(%arg0: i32) -> (i32, i32) {
    %c0_i32 = arith.constant 0 : i32
    %c0_i32_0 = arith.constant 0 : i32
    %c0_i32_1 = arith.constant 0 : i32
    return %c0_i32, %c0_i32_0 : i32, i32
  }
  func.func @transform_3(%arg0: i32) -> (i32, i32) {
    %c0_i32 = arith.constant 0 : i32
    %c0_i32_0 = arith.constant 0 : i32
    %c0_i32_1 = arith.constant 0 : i32
    return %c0_i32, %c0_i32_0 : i32, i32
  }
  func.func @transform_4(%arg0: i32) -> (i32, i32) {
    %c0_i32 = arith.constant 0 : i32
    %c0_i32_0 = arith.constant 0 : i32
    %c0_i32_1 = arith.constant 0 : i32
    return %c0_i32, %c0_i32_0 : i32, i32
  }
  func.func @transform_5(%arg0: i32) -> (i32, i32) {
    %c0_i32 = arith.constant 0 : i32
    %c0_i32_0 = arith.constant 0 : i32
    %c0_i32_1 = arith.constant 0 : i32
    return %c0_i32, %c0_i32_0 : i32, i32
  }
  func.func @transform_6(%arg0: i32) -> (i32, i32) {
    %c0_i32 = arith.constant 0 : i32
    %c0_i32_0 = arith.constant 0 : i32
    %c0_i32_1 = arith.constant 0 : i32
    return %c0_i32, %c0_i32_0 : i32, i32
  }
  func.func @transform_7(%arg0: i32) -> (i32, i32) {
    %c0_i32 = arith.constant 0 : i32
    %c0_i32_0 = arith.constant 0 : i32
    return %arg0, %c0_i32 : i32, i32
  }
}

</mosaic_0001>

<llo_original>
// kernel: tpu_custom_call.1
$region0: #{tpu_custom_call.1}
  #allocation0 [shape = 'u32[]', space=smem, size = 0x4, offset = 0x4, fixed_abs, tag = 'smem constant byte address 0x4 - core index']
  #allocation1 [shape = 'u32[144,128]{1,0:T(1,128)}', space=vmem, size = 0x12000, scoped, tag = 'internal scratch']
  %s0 = inlined_call_operand.hbm [shape: f32[16,128], index: 0, kind: input, shape index: {}]
  %s1 = inlined_call_operand.hbm [shape: f32[16,128], index: 1, kind: input, shape index: {}]
  %s2 = inlined_call_operand.hbm [shape: bf16[128,128], index: 2, kind: input, shape index: {}]
  %s3 = inlined_call_operand.vmem [shape: f32[1,128], index: 3, kind: input, shape index: {}]
  %s4 = inlined_call_operand.vmem [shape: f32[1,128], index: 4, kind: input, shape index: {}]
  %s5 = inlined_call_operand.hbm [shape: bf16[128,384], index: 5, kind: input, shape index: {}]
  %s6 = inlined_call_operand.vmem [shape: f32[1,384], index: 6, kind: input, shape index: {}]
  %s7 = inlined_call_operand.hbm [shape: bf16[16,384], index: 7, kind: output, shape index: {}]
  %s8 = sld [smem:[#allocation0]]
  $region54: #{tpu_custom_call.1} parent=0
    _
  %s10 = ssub.s32 1, %s8
  %s11 = scalar_select 0, %s10, %s8
  $region1: #{tpu_custom_call.1} parent=0
    #allocation2 [shape = 'u8[8192]{0}', space=vmem, size = 0x2000, scoped, tag = 'input window, operand 0, single buffered']
    #allocation3 [shape = 's32[1]{0}', space=sflag, size = 0x4, scoped, tag = 'scoped memory for tpu_custom_call.1']
    #allocation4 [shape = 's32[1]{0}', space=sflag, size = 0x4, scoped, tag = 'scoped memory for tpu_custom_call.1']
    #allocation5 [shape = 'u8[8192]{0}', space=vmem, size = 0x2000, scoped, tag = 'input window, operand 1, single buffered']
    #allocation6 [shape = 's32[1]{0}', space=sflag, size = 0x4, scoped, tag = 'scoped memory for tpu_custom_call.1']
    #allocation7 [shape = 'u8[32768]{0}', space=vmem, size = 0x8000, scoped, tag = 'input window, operand 2, single buffered']
    #allocation8 [shape = 'u8[98304]{0}', space=vmem, size = 0x18000, scoped, tag = 'input window, operand 5, single buffered']
    #allocation9 [shape = 's32[1]{0}', space=sflag, size = 0x4, scoped, tag = 'scoped memory for tpu_custom_call.1']
    #allocation10 [shape = 'u8[12288]{0}', space=vmem, size = 0x3000, scoped, tag = 'output window, operand 0, single buffered']
    %12 = vsyncpa [#allocation3], 0
    %13 = vsyncpa [#allocation6], 0
    %14 = vsyncpa [#allocation9], 0
    %15 = vsyncpa [#allocation4], 0
    // Predicated region
    $region2: #{tpu_custom_call.1} parent=1 // pred_check
      _
    $region3: #{tpu_custom_call.1} parent=1 // pred_check_branch
      %17 = sbr.rel (0) target = $region5
    $region4: #{tpu_custom_call.1} parent=1 // pred_region
      %s19 = ssub.s32 256, 256
      %20 = vsyncadd [#allocation3], %s19
      %s21 = sshll.u32 [#allocation2], 4
      %s22 = int_to_ptr.vmem [resolvable:$true] %s21
      %27 = dma.hbm_to_vmem [thread:$0]  %s0, 256, %s22, [#allocation3], 128, 128, 8
    $region5: #{tpu_custom_call.1} parent=1 // pred_fallthru
      _
    // Predicated region
    $region6: #{tpu_custom_call.1} parent=1 // pred_check
      _
    $region7: #{tpu_custom_call.1} parent=1 // pred_check_branch
      %29 = sbr.rel (0) target = $region9
    $region8: #{tpu_custom_call.1} parent=1 // pred_region
      %s31 = ssub.s32 256, 256
      %32 = vsyncadd [#allocation6], %s31
      %s33 = sshll.u32 [#allocation5], 4
      %s34 = int_to_ptr.vmem [resolvable:$true] %s33
      %39 = dma.hbm_to_vmem [thread:$0]  %s1, 256, %s34, [#allocation6], 128, 128, 8
    $region9: #{tpu_custom_call.1} parent=1 // pred_fallthru
      _
    // Predicated region
    $region10: #{tpu_custom_call.1} parent=1 // pred_check
      _
    $region11: #{tpu_custom_call.1} parent=1 // pred_check_branch
      %41 = sbr.rel (0) target = $region13
    $region12: #{tpu_custom_call.1} parent=1 // pred_region
      %s43 = ssub.s32 1024, 1024
      %44 = vsyncadd [#allocation6], %s43
      %s45 = sshll.u32 [#allocation7], 4
      %s46 = int_to_ptr.vmem [resolvable:$true] %s45
      %51 = dma.hbm_to_vmem [thread:$0]  %s2, 1024, %s46, [#allocation6], 64, 64, 4
    $region13: #{tpu_custom_call.1} parent=1 // pred_fallthru
      _
    // Predicated region
    $region14: #{tpu_custom_call.1} parent=1 // pred_check
      _
    $region15: #{tpu_custom_call.1} parent=1 // pred_check_branch
      %53 = sbr.rel (0) target = $region17
    $region16: #{tpu_custom_call.1} parent=1 // pred_region
      _
    $region17: #{tpu_custom_call.1} parent=1 // pred_fallthru
      _
    // Predicated region
    $region18: #{tpu_custom_call.1} parent=1 // pred_check
      _
    $region19: #{tpu_custom_call.1} parent=1 // pred_check_branch
      %55 = sbr.rel (0) target = $region21
    $region20: #{tpu_custom_call.1} parent=1 // pred_region
      _
    $region21: #{tpu_custom_call.1} parent=1 // pred_fallthru
      _
    // Predicated region
    $region22: #{tpu_custom_call.1} parent=1 // pred_check
      _
    $region23: #{tpu_custom_call.1} parent=1 // pred_check_branch
      %57 = sbr.rel (0) target = $region25
    $region24: #{tpu_custom_call.1} parent=1 // pred_region
      %s59 = ssub.s32 3072, 3072
      %60 = vsyncadd [#allocation9], %s59
      %s61 = sshll.u32 [#allocation8], 4
      %s62 = int_to_ptr.vmem [resolvable:$true] %s61
      %67 = dma.hbm_to_vmem [thread:$0]  %s5, 3072, %s62, [#allocation9], 192, 192, 12
    $region25: #{tpu_custom_call.1} parent=1 // pred_fallthru
      _
    // Predicated region
    $region26: #{tpu_custom_call.1} parent=1 // pred_check
      _
    $region27: #{tpu_custom_call.1} parent=1 // pred_check_branch
      %69 = sbr.rel (0) target = $region29
    $region28: #{tpu_custom_call.1} parent=1 // pred_region
      _
    $region29: #{tpu_custom_call.1} parent=1 // pred_fallthru
      _
    // Predicated region
    $region30: #{tpu_custom_call.1} parent=1 // pred_check
      _
    $region31: #{tpu_custom_call.1} parent=1 // pred_check_branch
      %71 = sbr.rel (0) target = $region33
    $region32: #{tpu_custom_call.1} parent=1 // pred_region
      %72 = dma.done [#allocation3], 256
    $region33: #{tpu_custom_call.1} parent=1 // pred_fallthru
      _
    // Predicated region
    $region34: #{tpu_custom_call.1} parent=1 // pred_check
      _
    $region35: #{tpu_custom_call.1} parent=1 // pred_check_branch
      %74 = sbr.rel (0) target = $region37
    $region36: #{tpu_custom_call.1} parent=1 // pred_region
      %75 = dma.done [#allocation6], 256
    $region37: #{tpu_custom_call.1} parent=1 // pred_fallthru
      _
    // Predicated region
    $region38: #{tpu_custom_call.1} parent=1 // pred_check
      _
    $region39: #{tpu_custom_call.1} parent=1 // pred_check_branch
      %77 = sbr.rel (0) target = $region41
    $region40: #{tpu_custom_call.1} parent=1 // pred_region
      %78 = dma.done [#allocation6], 1024
    $region41: #{tpu_custom_call.1} parent=1 // pred_fallthru
      _
    // Predicated region
    $region42: #{tpu_custom_call.1} parent=1 // pred_check
      _
    $region43: #{tpu_custom_call.1} parent=1 // pred_check_branch
      %80 = sbr.rel (0) target = $region45
    $region44: #{tpu_custom_call.1} parent=1 // pred_region
      %81 = dma.done [#allocation9], 3072
    $region45: #{tpu_custom_call.1} parent=1 // pred_fallthru
      _
    %v83 = vld [vmem:[#allocation2] sm:$0xff]
    %v84 = vld [vmem:[#allocation2 + $0x8] sm:$0xff]
    %v85 = vld [vmem:[#allocation5] sm:$0xff]
    %v86 = vld [vmem:[#allocation5 + $0x8] sm:$0xff]
    %v87 = vld [vmem:[#allocation7] sm:$0xf]
    %v88 = vld [vmem:[#allocation7 + $0x4] sm:$0xf]
    %v89 = vld [vmem:[#allocation7 + $0x8] sm:$0xf]
    %v90 = vld [vmem:[#allocation7 + $0xc] sm:$0xf]
    %v91 = vld [vmem:[#allocation7 + $0x10] sm:$0xf]
    %v92 = vld [vmem:[#allocation7 + $0x14] sm:$0xf]
    %v93 = vld [vmem:[#allocation7 + $0x18] sm:$0xf]
    %v94 = vld [vmem:[#allocation7 + $0x1c] sm:$0xf]
    %v95 = vld [vmem:[#allocation7 + $0x20] sm:$0xf]
    %v96 = vld [vmem:[#allocation7 + $0x24] sm:$0xf]
    %v97 = vld [vmem:[#allocation7 + $0x28] sm:$0xf]
    %v98 = vld [vmem:[#allocation7 + $0x2c] sm:$0xf]
    %v99 = vld [vmem:[#allocation7 + $0x30] sm:$0xf]
    %v100 = vld [vmem:[#allocation7 + $0x34] sm:$0xf]
    %v101 = vld [vmem:[#allocation7 + $0x38] sm:$0xf]
    %v102 = vld [vmem:[#allocation7 + $0x3c] sm:$0xf]
    %v103 = vld [vmem:[%s3] sm:$0x1]
    %v104 = vld [vmem:[%s4] sm:$0x1]
    %v105 = vpack.c.bf16 %v84, %v83
    %v107 = vlaneseq
    %v108 = vshrl.u32 %v107, 7
    %v109 = vsub.s32 0, %v108
    %v110 = vrot.slane %v103, %v109
    %v128 = vunpack.c.l.b16 %v87
    %v129 = vunpack.c.l.b16 %v88
    %v130 = vunpack.c.l.b16 %v89
    %v131 = vunpack.c.l.b16 %v90
    %v132 = vunpack.c.l.b16 %v91
    %v133 = vunpack.c.l.b16 %v92
    %v134 = vunpack.c.l.b16 %v93
    %v135 = vunpack.c.l.b16 %v94
    %v136 = vunpack.c.l.b16 %v95
    %v137 = vunpack.c.l.b16 %v96
    %v138 = vunpack.c.l.b16 %v97
    %v139 = vunpack.c.l.b16 %v98
    %v140 = vunpack.c.l.b16 %v99
    %v141 = vunpack.c.l.b16 %v100
    %v142 = vunpack.c.l.b16 %v101
    %v143 = vunpack.c.l.b16 %v102
    %v144 = vpack.c.b16 %v129, %v128
    %v145 = vpack.c.b16 %v131, %v130
    %v146 = vpack.c.b16 %v133, %v132
    %v147 = vpack.c.b16 %v135, %v134
    %v148 = vpack.c.b16 %v137, %v136
    %v149 = vpack.c.b16 %v139, %v138
    %v150 = vpack.c.b16 %v141, %v140
    %v151 = vpack.c.b16 %v143, %v142
    %160 = vmatprep.subr.bf16.mxu0 0
    %161 = vmatpush1.bf16.msra.mxu0 %v151
    %162 = vmatprep.subr.bf16.mxu0 0
    %163 = vmatpush1.bf16.msra.mxu0 %v150
    %164 = vmatprep.subr.bf16.mxu0 0
    %165 = vmatpush1.bf16.msra.mxu0 %v149
    %166 = vmatprep.subr.bf16.mxu0 0
    %167 = vmatpush1.bf16.msra.mxu0 %v148
    %168 = vmatprep.subr.bf16.mxu0 0
    %169 = vmatpush1.bf16.msra.mxu0 %v147
    %170 = vmatprep.subr.bf16.mxu0 0
    %171 = vmatpush1.bf16.msra.mxu0 %v146
    %172 = vmatprep.subr.bf16.mxu0 0
    %173 = vmatpush1.bf16.msra.mxu0 %v145
    %174 = vmatprep.subr.bf16.mxu0 0
    %175 = vmatpush1.bf16.msra.mxu0 %v144
    %176 = vmatprep.subr.bf16.mxu0 0
    %177 = vmatpush2.bf16.msra.mxu0 0
    %178 = vmatprep.subr.bf16.mxu0 0
    %179 = vmatpush2.bf16.msra.mxu0 0
    %180 = vmatprep.subr.bf16.mxu0 0
    %181 = vmatpush2.bf16.msra.mxu0 0
    %182 = vmatprep.subr.bf16.mxu0 0
    %183 = vmatpush2.bf16.msra.mxu0 0
    %184 = vmatprep.subr.bf16.mxu0 0
    %185 = vmatpush2.bf16.msra.mxu0 0
    %186 = vmatprep.subr.bf16.mxu0 0
    %187 = vmatpush2.bf16.msra.mxu0 0
    %188 = vmatprep.subr.bf16.mxu0 0
    %189 = vmatpush2.bf16.msra.mxu0 0
    %190 = vmatprep.subr.bf16.mxu0 0
    %191 = vmatpush2.bf16.msra.mxu0 0
    %192 = vmatprep.mubr.bf16.mxu0 0
    %193 = vmatmul.mubr.bf16.gmra.mxu0 %v105
    %v194 = vpop.f32.mrf.mxu0
    %v195 = vadd.f32 %v110, %v194
    %v196 = vpop.f32.mrf.mxu0
    %v197 = vpop.f32.mrf.mxu0
    %v198 = vadd.f32 %v110, %v197
    %v199 = vpop.f32.mrf.mxu0
    %200 = vdwg.mxu0
    %v201 = vmax.f32 %v195, 0.0
    %v202 = vmax.f32 %v198, 0.0
    %v203 = vpack.c.bf16 %v86, %v85
    %204 = vmatprep.subr.bf16.mxu0 0
    %205 = vmatpush1.bf16.msra.mxu0 %v151
    %206 = vmatprep.subr.bf16.mxu0 0
    %207 = vmatpush1.bf16.msra.mxu0 %v150
    %208 = vmatprep.subr.bf16.mxu0 0
    %209 = vmatpush1.bf16.msra.mxu0 %v149
    %210 = vmatprep.subr.bf16.mxu0 0
    %211 = vmatpush1.bf16.msra.mxu0 %v148
    %212 = vmatprep.subr.bf16.mxu0 0
    %213 = vmatpush1.bf16.msra.mxu0 %v147
    %214 = vmatprep.subr.bf16.mxu0 0
    %215 = vmatpush1.bf16.msra.mxu0 %v146
    %216 = vmatprep.subr.bf16.mxu0 0
    %217 = vmatpush1.bf16.msra.mxu0 %v145
    %218 = vmatprep.subr.bf16.mxu0 0
    %219 = vmatpush1.bf16.msra.mxu0 %v144
    %220 = vmatprep.subr.bf16.mxu0 0
    %221 = vmatpush2.bf16.msra.mxu0 0
    %222 = vmatprep.subr.bf16.mxu0 0
    %223 = vmatpush2.bf16.msra.mxu0 0
    %224 = vmatprep.subr.bf16.mxu0 0
    %225 = vmatpush2.bf16.msra.mxu0 0
    %226 = vmatprep.subr.bf16.mxu0 0
    %227 = vmatpush2.bf16.msra.mxu0 0
    %228 = vmatprep.subr.bf16.mxu0 0
    %229 = vmatpush2.bf16.msra.mxu0 0
    %230 = vmatprep.subr.bf16.mxu0 0
    %231 = vmatpush2.bf16.msra.mxu0 0
    %232 = vmatprep.subr.bf16.mxu0 0
    %233 = vmatpush2.bf16.msra.mxu0 0
    %234 = vmatprep.subr.bf16.mxu0 0
    %235 = vmatpush2.bf16.msra.mxu0 0
    %236 = vmatprep.mubr.bf16.mxu0 0
    %237 = vmatmul.mubr.bf16.gmra.mxu0 %v203
    %v238 = vpop.f32.mrf.mxu0
    %v239 = vadd.f32 %v110, %v238
    %v240 = vpop.f32.mrf.mxu0
    %v241 = vpop.f32.mrf.mxu0
    %v242 = vadd.f32 %v110, %v241
    %v243 = vpop.f32.mrf.mxu0
    %244 = vdwg.mxu0
    %v245 = vmax.f32 %v239, 0.0
    %v246 = vmax.f32 %v242, 0.0
    %v248 = vlaneseq
    %v249 = vshrl.u32 %v248, 7
    %v250 = vsub.s32 0, %v249
    %v251 = vrot.slane %v104, %v250
    %v253 = vmul.f32 %v201, %v251
    %v254 = vmul.f32 %v202, %v251
    %255 = vadd.xlane.f32.xlu0 %v253
    %v256 = vpop.xlane.xlu0 %255
    %257 = vadd.xlane.f32.xlu0 %v254
    %v258 = vpop.xlane.xlu0 %257
    %v259 = vmul.f32 %v245, %v251
    %v260 = vmul.f32 %v246, %v251
    %261 = vadd.xlane.f32.xlu0 %v259
    %v262 = vpop.xlane.xlu0 %261
    %263 = vadd.xlane.f32.xlu0 %v260
    %v264 = vpop.xlane.xlu0 %263
    %v265 = vmax.f32 %v256, %v262
    %v266 = vmax.f32 %v258, %v264
    %v267 = vsub.f32 %v256, %v265
    %v268 = vsub.f32 %v258, %v266
    %v269 = vmul.f32 %v267, 1.442695
    %v270 = vpow.pop %v269
    %v271 = vmul.f32 %v268, 1.442695
    %v272 = vpow.pop %v271
    %v273 = vsub.f32 %v262, %v265
    %v274 = vsub.f32 %v264, %v266
    %v275 = vmul.f32 %v273, 1.442695
    %v276 = vpow.pop %v275
    %v277 = vmul.f32 %v274, 1.442695
    %v278 = vpow.pop %v277
    %v279 = vadd.f32 %v270, %v276
    %v280 = vadd.f32 %v272, %v278
    %v281 = vrcp.pop %v279
    %v282 = vrcp.pop %v280
    %v283 = vmul.f32 %v270, %v281
    %v284 = vmul.f32 %v272, %v282
    %v285 = vmul.f32 %v283, %v83
    %v286 = vmul.f32 %v284, %v84
    %v287 = vmul.f32 %v276, %v281
    %v288 = vmul.f32 %v278, %v282
    %v289 = vmul.f32 %v287, %v85
    %v290 = vmul.f32 %v288, %v86
    %v291 = vadd.f32 %v285, %v289
    %v292 = vadd.f32 %v286, %v290
    %v293 = vpack.c.bf16 %v292, %v291
    %v294 = vld [vmem:[#allocation8] sm:$0xff]
    %v295 = vld [vmem:[#allocation8 + $0x8] sm:$0xf]
    %v296 = vld [vmem:[#allocation8 + $0xc] sm:$0xff]
    %v297 = vld [vmem:[#allocation8 + $0x14] sm:$0xf]
    %v298 = vld [vmem:[#allocation8 + $0x18] sm:$0xff]
    %v299 = vld [vmem:[#allocation8 + $0x20] sm:$0xf]
    %v300 = vld [vmem:[#allocation8 + $0x24] sm:$0xff]
    %v301 = vld [vmem:[#allocation8 + $0x2c] sm:$0xf]
    %v302 = vld [vmem:[#allocation8 + $0x30] sm:$0xff]
    %v303 = vld [vmem:[#allocation8 + $0x38] sm:$0xf]
    %v304 = vld [vmem:[#allocation8 + $0x3c] sm:$0xff]
    %v305 = vld [vmem:[#allocation8 + $0x44] sm:$0xf]
    %v306 = vld [vmem:[#allocation8 + $0x48] sm:$0xff]
    %v307 = vld [vmem:[#allocation8 + $0x50] sm:$0xf]
    %v308 = vld [vmem:[#allocation8 + $0x54] sm:$0xff]
    %v309 = vld [vmem:[#allocation8 + $0x5c] sm:$0xf]
    %v310 = vld [vmem:[#allocation8 + $0x60] sm:$0xff]
    %v311 = vld [vmem:[#allocation8 + $0x68] sm:$0xf]
    %v312 = vld [vmem:[#allocation8 + $0x6c] sm:$0xff]
    %v313 = vld [vmem:[#allocation8 + $0x74] sm:$0xf]
    %v314 = vld [vmem:[#allocation8 + $0x78] sm:$0xff]
    %v315 = vld [vmem:[#allocation8 + $0x80] sm:$0xf]
    %v316 = vld [vmem:[#allocation8 + $0x84] sm:$0xff]
    %v317 = vld [vmem:[#allocation8 + $0x8c] sm:$0xf]
    %v318 = vld [vmem:[#allocation8 + $0x90] sm:$0xff]
    %v319 = vld [vmem:[#allocation8 + $0x98] sm:$0xf]
    %v320 = vld [vmem:[#allocation8 + $0x9c] sm:$0xff]
    %v321 = vld [vmem:[#allocation8 + $0xa4] sm:$0xf]
    %v322 = vld [vmem:[#allocation8 + $0xa8] sm:$0xff]
    %v323 = vld [vmem:[#allocation8 + $0xb0] sm:$0xf]
    %v324 = vld [vmem:[#allocation8 + $0xb4] sm:$0xff]
    %v325 = vld [vmem:[#allocation8 + $0xbc] sm:$0xf]
    %v326 = vld [vmem:[%s6] sm:$0x7]
    %v328 = vlaneseq
    %v329 = vshrl.u32 %v328, 7
    %v330 = vsub.s32 0, %v329
    %v331 = vrot.slane %v326, %v330
    %v332 = vlaneseq
    %v333 = vshrl.u32 %v332, 7
    %v334 = vsub.s32 1, %v333
    %v335 = vrot.slane %v326, %v334
    %v336 = vlaneseq
    %v337 = vshrl.u32 %v336, 7
    %v338 = vsub.s32 2, %v337
    %v339 = vrot.slane %v326, %v338
    %v375 = vunpack.c.l.b16 %v294
    %v376 = vunpack.c.h.b16 %v294
    %v377 = vunpack.c.l.b16 %v295
    %v378 = vunpack.c.l.b16 %v296
    %v379 = vunpack.c.h.b16 %v296
    %v380 = vunpack.c.l.b16 %v297
    %v381 = vunpack.c.l.b16 %v298
    %v382 = vunpack.c.h.b16 %v298
    %v383 = vunpack.c.l.b16 %v299
    %v384 = vunpack.c.l.b16 %v300
    %v385 = vunpack.c.h.b16 %v300
    %v386 = vunpack.c.l.b16 %v301
    %v387 = vunpack.c.l.b16 %v302
    %v388 = vunpack.c.h.b16 %v302
    %v389 = vunpack.c.l.b16 %v303
    %v390 = vunpack.c.l.b16 %v304
    %v391 = vunpack.c.h.b16 %v304
    %v392 = vunpack.c.l.b16 %v305
    %v393 = vunpack.c.l.b16 %v306
    %v394 = vunpack.c.h.b16 %v306
    %v395 = vunpack.c.l.b16 %v307
    %v396 = vunpack.c.l.b16 %v308
    %v397 = vunpack.c.h.b16 %v308
    %v398 = vunpack.c.l.b16 %v309
    %v399 = vunpack.c.l.b16 %v310
    %v400 = vunpack.c.h.b16 %v310
    %v401 = vunpack.c.l.b16 %v311
    %v402 = vunpack.c.l.b16 %v312
    %v403 = vunpack.c.h.b16 %v312
    %v404 = vunpack.c.l.b16 %v313
    %v405 = vunpack.c.l.b16 %v314
    %v406 = vunpack.c.h.b16 %v314
    %v407 = vunpack.c.l.b16 %v315
    %v408 = vunpack.c.l.b16 %v316
    %v409 = vunpack.c.h.b16 %v316
    %v410 = vunpack.c.l.b16 %v317
    %v411 = vunpack.c.l.b16 %v318
    %v412 = vunpack.c.h.b16 %v318
    %v413 = vunpack.c.l.b16 %v319
    %v414 = vunpack.c.l.b16 %v320
    %v415 = vunpack.c.h.b16 %v320
    %v416 = vunpack.c.l.b16 %v321
    %v417 = vunpack.c.l.b16 %v322
    %v418 = vunpack.c.h.b16 %v322
    %v419 = vunpack.c.l.b16 %v323
    %v420 = vunpack.c.l.b16 %v324
    %v421 = vunpack.c.h.b16 %v324
    %v422 = vunpack.c.l.b16 %v325
    %v423 = vpack.c.b16 %v378, %v375
    %v424 = vpack.c.b16 %v379, %v376
    %v425 = vpack.c.b16 %v380, %v377
    %v426 = vpack.c.b16 %v384, %v381
    %v427 = vpack.c.b16 %v385, %v382
    %v428 = vpack.c.b16 %v386, %v383
    %v429 = vpack.c.b16 %v390, %v387
    %v430 = vpack.c.b16 %v391, %v388
    %v431 = vpack.c.b16 %v392, %v389
    %v432 = vpack.c.b16 %v396, %v393
    %v433 = vpack.c.b16 %v397, %v394
    %v434 = vpack.c.b16 %v398, %v395
    %v435 = vpack.c.b16 %v402, %v399
    %v436 = vpack.c.b16 %v403, %v400
    %v437 = vpack.c.b16 %v404, %v401
    %v438 = vpack.c.b16 %v408, %v405
    %v439 = vpack.c.b16 %v409, %v406
    %v440 = vpack.c.b16 %v410, %v407
    %v441 = vpack.c.b16 %v414, %v411
    %v442 = vpack.c.b16 %v415, %v412
    %v443 = vpack.c.b16 %v416, %v413
    %v444 = vpack.c.b16 %v420, %v417
    %v445 = vpack.c.b16 %v421, %v418
    %v446 = vpack.c.b16 %v422, %v419
    %471 = vmatprep.subr.bf16.mxu0 %v445
    %472 = vmatpush1.bf16.msra.mxu0 %v444
    %473 = vmatprep.subr.bf16.mxu0 %v442
    %474 = vmatpush1.bf16.msra.mxu0 %v441
    %475 = vmatprep.subr.bf16.mxu0 %v439
    %476 = vmatpush1.bf16.msra.mxu0 %v438
    %477 = vmatprep.subr.bf16.mxu0 %v436
    %478 = vmatpush1.bf16.msra.mxu0 %v435
    %479 = vmatprep.subr.bf16.mxu0 %v433
    %480 = vmatpush1.bf16.msra.mxu0 %v432
    %481 = vmatprep.subr.bf16.mxu0 %v430
    %482 = vmatpush1.bf16.msra.mxu0 %v429
    %483 = vmatprep.subr.bf16.mxu0 %v427
    %484 = vmatpush1.bf16.msra.mxu0 %v426
    %485 = vmatprep.subr.bf16.mxu0 %v424
    %486 = vmatpush1.bf16.msra.mxu0 %v423
    %487 = vmatprep.subr.bf16.mxu0 0
    %488 = vmatpush2.bf16.msra.mxu0 0
    %489 = vmatprep.subr.bf16.mxu0 0
    %490 = vmatpush2.bf16.msra.mxu0 0
    %491 = vmatprep.subr.bf16.mxu0 0
    %492 = vmatpush2.bf16.msra.mxu0 0
    %493 = vmatprep.subr.bf16.mxu0 0
    %494 = vmatpush2.bf16.msra.mxu0 0
    %495 = vmatprep.subr.bf16.mxu0 0
    %496 = vmatpush2.bf16.msra.mxu0 0
    %497 = vmatprep.subr.bf16.mxu0 0
    %498 = vmatpush2.bf16.msra.mxu0 0
    %499 = vmatprep.subr.bf16.mxu0 0
    %500 = vmatpush2.bf16.msra.mxu0 0
    %501 = vmatprep.subr.bf16.mxu0 0
    %502 = vmatpush2.bf16.msra.mxu0 0
    %503 = vmatprep.mubr.bf16.mxu0 0
    %504 = vmatmul.mubr.bf16.gmra.mxu0 %v293
    %v505 = vpop.f32.mrf.mxu0
    %v506 = vadd.f32 %v331, %v505
    %v507 = vpop.f32.mrf.mxu0
    %v508 = vadd.f32 %v335, %v507
    %v509 = vpop.f32.mrf.mxu0
    %v510 = vadd.f32 %v331, %v509
    %v511 = vpop.f32.mrf.mxu0
    %v512 = vadd.f32 %v335, %v511
    %513 = vdwg.mxu0
    %514 = vmatprep.subr.bf16.mxu0 0
    %515 = vmatpush1.bf16.msra.mxu0 %v446
    %516 = vmatprep.subr.bf16.mxu0 0
    %517 = vmatpush1.bf16.msra.mxu0 %v443
    %518 = vmatprep.subr.bf16.mxu0 0
    %519 = vmatpush1.bf16.msra.mxu0 %v440
    %520 = vmatprep.subr.bf16.mxu0 0
    %521 = vmatpush1.bf16.msra.mxu0 %v437
    %522 = vmatprep.subr.bf16.mxu0 0
    %523 = vmatpush1.bf16.msra.mxu0 %v434
    %524 = vmatprep.subr.bf16.mxu0 0
    %525 = vmatpush1.bf16.msra.mxu0 %v431
    %526 = vmatprep.subr.bf16.mxu0 0
    %527 = vmatpush1.bf16.msra.mxu0 %v428
    %528 = vmatprep.subr.bf16.mxu0 0
    %529 = vmatpush1.bf16.msra.mxu0 %v425
    %530 = vmatprep.subr.bf16.mxu0 0
    %531 = vmatpush2.bf16.msra.mxu0 0
    %532 = vmatprep.subr.bf16.mxu0 0
    %533 = vmatpush2.bf16.msra.mxu0 0
    %534 = vmatprep.subr.bf16.mxu0 0
    %535 = vmatpush2.bf16.msra.mxu0 0
    %536 = vmatprep.subr.bf16.mxu0 0
    %537 = vmatpush2.bf16.msra.mxu0 0
    %538 = vmatprep.subr.bf16.mxu0 0
    %539 = vmatpush2.bf16.msra.mxu0 0
    %540 = vmatprep.subr.bf16.mxu0 0
    %541 = vmatpush2.bf16.msra.mxu0 0
    %542 = vmatprep.subr.bf16.mxu0 0
    %543 = vmatpush2.bf16.msra.mxu0 0
    %544 = vmatprep.subr.bf16.mxu0 0
    %545 = vmatpush2.bf16.msra.mxu0 0
    %546 = vmatprep.mubr.bf16.mxu0 0
    %547 = vmatmul.mubr.bf16.gmra.mxu0 %v293
    %v548 = vpop.f32.mrf.mxu0
    %v549 = vadd.f32 %v339, %v548
    %v550 = vpop.f32.mrf.mxu0
    %v551 = vpop.f32.mrf.mxu0
    %v552 = vadd.f32 %v339, %v551
    %v553 = vpop.f32.mrf.mxu0
    %554 = vdwg.mxu0
    %v555 = vpack.c.bf16 %v510, %v506
    %v556 = vpack.c.bf16 %v512, %v508
    %v557 = vpack.c.bf16 %v552, %v549
    %v561 = vunpack.c.l.b16 %v555
    %v562 = vunpack.c.l.b16 %v556
    %v563 = vunpack.c.l.b16 %v557
    %v564 = vunpack.c.h.b16 %v555
    %v565 = vunpack.c.h.b16 %v556
    %v566 = vunpack.c.h.b16 %v557
    %v567 = vpack.c.b16 %v562, %v561
    %v568 = vpack.c.b16 %v563, %v563
    %v569 = vpack.c.b16 %v565, %v564
    %v570 = vpack.c.b16 %v566, %v566
    %575 = vst [vmem:[#allocation10] sm:$0xff] %v567
    %576 = vst [vmem:[#allocation10 + $0x8] sm:$0xf] %v568
    %577 = vst [vmem:[#allocation10 + $0xc] sm:$0xff] %v569
    %578 = vst [vmem:[#allocation10 + $0x14] sm:$0xf] %v570
    // Predicated region
    $region46: #{tpu_custom_call.1} parent=1 // pred_check
      _
    $region47: #{tpu_custom_call.1} parent=1 // pred_check_branch
      %580 = sbr.rel (0) target = $region49
    $region48: #{tpu_custom_call.1} parent=1 // pred_region
      %s582 = ssub.s32 384, 384
      %583 = vsyncadd [#allocation4], %s582
      %s584 = sshll.u32 [#allocation10], 4
      %s585 = int_to_ptr.vmem [resolvable:$true] %s584
      %590 = dma.vmem_to_hbm [thread:$0]  %s585, 384, %s7, [#allocation4], 192, 192, 12
    $region49: #{tpu_custom_call.1} parent=1 // pred_fallthru
      _
    // Predicated region
    $region50: #{tpu_custom_call.1} parent=1 // pred_check
      _
    $region51: #{tpu_custom_call.1} parent=1 // pred_check_branch
      %592 = sbr.rel (0) target = $region53
    $region52: #{tpu_custom_call.1} parent=1 // pred_region
      %593 = dma.done [#allocation4], 384
    $region53: #{tpu_custom_call.1} parent=1 // pred_fallthru
      _
    %594 = vsyncpa [#allocation3], 1
    %595 = vsyncpa [#allocation6], 1
    %596 = vsyncpa [#allocation9], 1
    %597 = vsyncpa [#allocation4], 1

</llo_original>
